<compile_context>
chip_gen: v6e
topology: v6e:2x2x1
jax: 0.10.0
libtpu: 0.0.40
codegen_flags: <defaults>
</compile_context>

<pallas_src>
import functools
import math

import jax
import jax.numpy as jnp
from jax.experimental import pallas as pl
from jax.experimental.pallas import tpu as pltpu


def _round_up(x, m):
    return ((x + m - 1) // m) * m


def _sublane_rows(dtype):
    # Rows packed per sublane group: 8 for 4-byte, 16 for 2-byte, 32 for 1-byte.
    itemsize = jnp.dtype(dtype).itemsize
    return max(8, 32 // itemsize)


def _rmsnorm_kernel(x_ref, scale_ref, o_ref, *, eps):
    # x_ref:     (TB, HW) rows for this grid step
    # scale_ref: (1,  HW) learned scale, resident across the grid
    # o_ref:     (TB, HW) output rows
    x = x_ref[...]
    xf = x.astype(jnp.float32)
    ms = jnp.mean(xf * xf, axis=-1, keepdims=True)            # (TB, 1) per-row, f32
    inv_rms = jax.lax.rsqrt(ms + eps)                         # (TB, 1) f32

    if o_ref.dtype == jnp.bfloat16:
        # Reduction stays f32 for accuracy; apply the normalize in bf16 so the
        # elementwise multiplies use packed bf16 VALU ops (v6e/v7x).
        s = scale_ref[...].astype(jnp.bfloat16)               # (1, HW)
        o_ref[...] = x.astype(jnp.bfloat16) * s * inv_rms.astype(jnp.bfloat16)
    else:
        s = scale_ref[...].astype(jnp.float32)                # (1, HW) broadcasts
        o_ref[...] = (s * xf * inv_rms).astype(o_ref.dtype)


def rmsnorm(x, scale, eps=1e-8, block_bytes=2 * 1024 * 1024):
    """RMSNorm over the last two dims of x (normalized_shape = (H, W)).

    x:     (..., H, W)
    scale: (H, W)
    """
    *lead, H, W = x.shape
    assert scale.shape == (H, W), "scale must match normalized_shape (H, W)"
    hw = H * W
    n = math.prod(lead) if lead else 1

    x_flat = x.reshape(n, hw)
    scale_flat = scale.reshape(1, hw)

    itemsize = jnp.dtype(x.dtype).itemsize
    sub = _sublane_rows(x.dtype)

    # Rows per grid step: ~block_bytes per block, rounded down to the sublane
    # multiple; capped so the grid has >= 2 steps when n allows (megacore/v7x).
    tb = max(sub, (block_bytes // (hw * itemsize)) // sub * sub)
    tb = min(tb, _round_up(pl.cdiv(n, 2), sub))
    tb = max(tb, sub)
    if tb >= n:
        # Single full block: block shape == array shape is always legal.
        tb = n

    kernel = functools.partial(_rmsnorm_kernel, eps=eps)

    out_flat = pl.pallas_call(
        kernel,
        out_shape=jax.ShapeDtypeStruct((n, hw), x.dtype),
        grid_spec=pltpu.PrefetchScalarGridSpec(
            num_scalar_prefetch=0,
            grid=(pl.cdiv(n, tb),),
            in_specs=[
                pl.BlockSpec((tb, hw), lambda i: (i, 0)),
                pl.BlockSpec((1, hw), lambda i: (0, 0)),   # constant block: stays in VMEM
            ],
            out_specs=pl.BlockSpec((tb, hw), lambda i: (i, 0)),
        ),
        compiler_params=pltpu.CompilerParams(
            # Row axis is embarrassingly parallel -> shard across TCs (v7x).
            dimension_semantics=("parallel",),
        ),
    )(x_flat, scale_flat)

    return out_flat.reshape(*lead, H, W)


def rmsnorm_ref(x, scale, eps=1e-8):
    # Pure-JAX reference mirroring the PyTorch forward.
    rms = jnp.sqrt(
        jnp.mean(x.astype(jnp.float32) ** 2, axis=(-2, -1), keepdims=True) + eps
    )
    return (scale.astype(jnp.float32) * x.astype(jnp.float32) / rms).astype(x.dtype)


if __name__ == "__main__":
    key = jax.random.PRNGKey(0)

    # Shapes consistent with the module: normalized_shape = (H, W) = (16, 32).
    B, C, H, W = 2, 4, 16, 32
    x = jax.random.normal(key, (B, C, H, W), dtype=jnp.float32)

    # Deterministic parameter init: scale = ones(normalized_shape), as in __init__.
    scale = jnp.ones((H, W), dtype=jnp.float32)

    out = jax.block_until_ready(rmsnorm(x, scale, eps=1e-8))
    ref = rmsnorm_ref(x, scale, eps=1e-8)
    assert out.shape == x.shape
    assert jnp.allclose(out, ref, atol=1e-5, rtol=1e-5), "mismatch vs reference"

    # Partial-last-block path: n = 15 rows with tb = 8 -> grid of 2, tail of 7
    # rows handled by Pallas masked boundary (no wrapper pad/slice).
    key2, key3 = jax.random.split(jax.random.PRNGKey(0))
    B2, C2, H2, W2 = 3, 5, 8, 16   # n = 15 rows, hw = 128
    x2 = jax.random.normal(key2, (B2, C2, H2, W2), dtype=jnp.float32)
    scale2 = 1.0 + 0.1 * jax.random.normal(key3, (H2, W2), dtype=jnp.float32)

    out2 = jax.block_until_ready(rmsnorm(x2, scale2, eps=1e-8))
    ref2 = rmsnorm_ref(x2, scale2, eps=1e-8)
    assert out2.shape == x2.shape
    assert jnp.allclose(out2, ref2, atol=1e-5, rtol=1e-5), "mismatch vs reference (tail)"

    # bf16 path (f32 reduction, bf16 normalize): looser tolerance.
    x3 = x.astype(jnp.bfloat16)
    scale3 = scale.astype(jnp.bfloat16)
    out3 = jax.block_until_ready(rmsnorm(x3, scale3, eps=1e-8))
    ref3 = rmsnorm_ref(x3, scale3, eps=1e-8)
    assert out3.shape == x3.shape
    assert jnp.allclose(out3.astype(jnp.float32), ref3.astype(jnp.float32),
                        atol=3e-2, rtol=3e-2), "mismatch vs reference (bf16)"

    print("KERNEL_OK")
</pallas_src>

<mosaic_0001>
module attributes {stable_mosaic.version = 11 : i64} {
  func.func @_rmsnorm_kernel(%arg0: i32, %arg1: memref<8x512xf32, #tpu.memory_space<vmem>>, %arg2: memref<1x512xf32, #tpu.memory_space<vmem>>, %arg3: memref<8x512xf32, #tpu.memory_space<vmem>>) attributes {dimension_semantics = [#tpu.dimension_semantics<parallel>], iteration_bounds = array<i64: 1>, scalar_prefetch = 0 : i64, scratch_operands = 0 : i64, tpu.core_type = #tpu.core_type<tc>, window_params = [{transform_indices = @transform_0, window_bounds = array<i64: 8, 512>}, {pipeline_mode = #tpu.pipeline_mode<synchronous>, transform_indices = @transform_1, window_bounds = array<i64: 1, 512>}, {transform_indices = @transform_2, window_bounds = array<i64: 8, 512>}]} {
    %c0 = arith.constant 0 : index
    %c0_0 = arith.constant 0 : index
    %0 = vector.load %arg1[%c0, %c0_0] : memref<8x512xf32, #tpu.memory_space<vmem>>, vector<8x512xf32>
    %1 = arith.mulf %0, %0 : vector<8x512xf32>
    %cst = arith.constant dense<0.000000e+00> : vector<8xf32>
    %2 = vector.multi_reduction <add>, %1, %cst [1] : vector<8x512xf32> to vector<8xf32>
    %3 = vector.shape_cast %2 : vector<8xf32> to vector<8x1xf32>
    %cst_1 = arith.constant 5.120000e+02 : f32
    %4 = vector.broadcast %cst_1 : f32 to vector<8x1xf32>
    %5 = arith.divf %3, %4 : vector<8x1xf32>
    %cst_2 = arith.constant 9.99999993E-9 : f32
    %6 = vector.broadcast %cst_2 : f32 to vector<8x1xf32>
    %7 = arith.addf %5, %6 : vector<8x1xf32>
    %8 = math.rsqrt %7 : vector<8x1xf32>
    %c0_3 = arith.constant 0 : index
    %c0_4 = arith.constant 0 : index
    %9 = vector.load %arg2[%c0_3, %c0_4] : memref<1x512xf32, #tpu.memory_space<vmem>>, vector<1x512xf32>
    %10 = vector.broadcast %9 : vector<1x512xf32> to vector<8x512xf32>
    %11 = arith.mulf %10, %0 : vector<8x512xf32>
    %12 = vector.broadcast %8 : vector<8x1xf32> to vector<8x512xf32>
    %13 = arith.mulf %11, %12 : vector<8x512xf32>
    %c0_5 = arith.constant 0 : index
    %c0_6 = arith.constant 0 : index
    %14 = vector.load %arg3[%c0_5, %c0_6] : memref<8x512xf32, #tpu.memory_space<vmem>>, vector<8x512xf32>
    tpu.vector_store %arg3[%c0_5, %c0_6], %13 {strides = array<i32>} : memref<8x512xf32, #tpu.memory_space<vmem>>, vector<8x512xf32>,
    return
  }
  func.func @transform_0(%arg0: i32) -> (i32, i32) {
    %c0_i32 = arith.constant 0 : i32
    %c0_i32_0 = arith.constant 0 : i32
    return %arg0, %c0_i32 : i32, i32
  }
  func.func @transform_1(%arg0: i32) -> (i32, i32) {
    %c0_i32 = arith.constant 0 : i32
    %c0_i32_0 = arith.constant 0 : i32
    %c0_i32_1 = arith.constant 0 : i32
    return %c0_i32, %c0_i32_0 : i32, i32
  }
  func.func @transform_2(%arg0: i32) -> (i32, i32) {
    %c0_i32 = arith.constant 0 : i32
    %c0_i32_0 = arith.constant 0 : i32
    return %arg0, %c0_i32 : i32, i32
  }
}

</mosaic_0001>

<llo_original>
// kernel: tpu_custom_call.1
$region0: #{tpu_custom_call.1}
  #allocation0 [shape = 'u32[]', space=smem, size = 0x4, offset = 0x4, fixed_abs, tag = 'smem constant byte address 0x4 - core index']
  #allocation1 [shape = 'u32[144,128]{1,0:T(1,128)}', space=vmem, size = 0x12000, scoped, tag = 'internal scratch']
  %s0 = inlined_call_operand.hbm [shape: f32[8,512], index: 0, kind: input, shape index: {}]
  %s1 = inlined_call_operand.hbm [shape: f32[1,512], index: 1, kind: input, shape index: {}]
  %s2 = inlined_call_operand.hbm [shape: f32[8,512], index: 2, kind: output, shape index: {}]
  %s3 = sld [smem:[#allocation0]]
  $region26: #{tpu_custom_call.1} parent=0
    _
  %s5 = ssub.s32 1, %s3
  %s6 = scalar_select 0, %s5, %s3
  $region1: #{tpu_custom_call.1} parent=0
    #allocation2 [shape = 'u8[16384]{0}', space=vmem, size = 0x4000, scoped, tag = 'input window, operand 0, single buffered']
    #allocation3 [shape = 's32[1]{0}', space=sflag, size = 0x4, scoped, tag = 'scoped memory for tpu_custom_call.1']
    #allocation4 [shape = 's32[1]{0}', space=sflag, size = 0x4, scoped, tag = 'scoped memory for tpu_custom_call.1']
    #allocation5 [shape = 'u8[2048]{0}', space=vmem, size = 0x800, scoped, tag = 'input window, operand 1, single buffered']
    #allocation6 [shape = 's32[1]{0}', space=sflag, size = 0x4, scoped, tag = 'scoped memory for tpu_custom_call.1']
    #allocation7 [shape = 'u8[16384]{0}', space=vmem, size = 0x4000, scoped, tag = 'output window, operand 0, single buffered']
    %7 = vsyncpa [#allocation3], 0
    %8 = vsyncpa [#allocation6], 0
    %9 = vsyncpa [#allocation4], 0
    // Predicated region
    $region2: #{tpu_custom_call.1} parent=1 // pred_check
      _
    $region3: #{tpu_custom_call.1} parent=1 // pred_check_branch
      %11 = sbr.rel (0) target = $region5
    $region4: #{tpu_custom_call.1} parent=1 // pred_region
      %s13 = ssub.s32 512, 512
      %14 = vsyncadd [#allocation3], %s13
      %s16 = sshll.u32 [#allocation2], 4
      %s17 = int_to_ptr.vmem [resolvable:$true] %s16
      %19 = dma.hbm_to_vmem [thread:$0]  %s0, 512, %s17, [#allocation3]
    $region5: #{tpu_custom_call.1} parent=1 // pred_fallthru
      _
    // Predicated region
    $region6: #{tpu_custom_call.1} parent=1 // pred_check
      _
    $region7: #{tpu_custom_call.1} parent=1 // pred_check_branch
      %21 = sbr.rel (0) target = $region9
    $region8: #{tpu_custom_call.1} parent=1 // pred_region
      %s23 = ssub.s32 64, 64
      %24 = vsyncadd [#allocation6], %s23
      %s26 = sshll.u32 [#allocation5], 4
      %s27 = int_to_ptr.vmem [resolvable:$true] %s26
      %29 = dma.hbm_to_vmem [thread:$0]  %s1, 64, %s27, [#allocation6]
    $region9: #{tpu_custom_call.1} parent=1 // pred_fallthru
      _
    // Predicated region
    $region10: #{tpu_custom_call.1} parent=1 // pred_check
      _
    $region11: #{tpu_custom_call.1} parent=1 // pred_check_branch
      %31 = sbr.rel (0) target = $region13
    $region12: #{tpu_custom_call.1} parent=1 // pred_region
      %32 = dma.done [#allocation3], 512
    $region13: #{tpu_custom_call.1} parent=1 // pred_fallthru
      _
    // Predicated region
    $region14: #{tpu_custom_call.1} parent=1 // pred_check
      _
    $region15: #{tpu_custom_call.1} parent=1 // pred_check_branch
      %34 = sbr.rel (0) target = $region17
    $region16: #{tpu_custom_call.1} parent=1 // pred_region
      %35 = dma.done [#allocation6], 64
    $region17: #{tpu_custom_call.1} parent=1 // pred_fallthru
      _
    %v36 = vld [vmem:[#allocation2] sm:$0xff]
    %v37 = vld [vmem:[#allocation2 + $0x8] sm:$0xff]
    %v38 = vld [vmem:[#allocation2 + $0x10] sm:$0xff]
    %v39 = vld [vmem:[#allocation2 + $0x18] sm:$0xff]
    %v40 = vmul.f32 %v36, %v36
    %v41 = vmul.f32 %v37, %v37
    %v42 = vmul.f32 %v38, %v38
    %v43 = vmul.f32 %v39, %v39
    %v44 = vadd.f32 %v40, %v41
    %v45 = vadd.f32 %v44, %v42
    %v46 = vadd.f32 %v45, %v43
    %47 = vadd.xlane.f32.xlu0 %v46
    %v48 = vpop.xlane.xlu0 %47
    %v49 = vrcp.pop 512.0
    %v50 = vmul.f32 %v48, %v49
    %v51 = vadd.f32 %v50, 1e-08
    %v52 = vrsqrt.pop %v51
    %v53 = vld [vmem:[#allocation5] sm:$0xf]
    %v55 = vlaneseq
    %v56 = vshrl.u32 %v55, 7
    %v57 = vsub.s32 0, %v56
    %v58 = vrot.slane %v53, %v57
    %v59 = vlaneseq
    %v60 = vshrl.u32 %v59, 7
    %v61 = vsub.s32 1, %v60
    %v62 = vrot.slane %v53, %v61
    %v63 = vlaneseq
    %v64 = vshrl.u32 %v63, 7
    %v65 = vsub.s32 2, %v64
    %v66 = vrot.slane %v53, %v65
    %v67 = vlaneseq
    %v68 = vshrl.u32 %v67, 7
    %v69 = vsub.s32 3, %v68
    %v70 = vrot.slane %v53, %v69
    %v75 = vmul.f32 %v58, %v36
    %v76 = vmul.f32 %v62, %v37
    %v77 = vmul.f32 %v66, %v38
    %v78 = vmul.f32 %v70, %v39
    %v79 = vmul.f32 %v75, %v52
    %v80 = vmul.f32 %v76, %v52
    %v81 = vmul.f32 %v77, %v52
    %v82 = vmul.f32 %v78, %v52
    %83 = vst [vmem:[#allocation7] sm:$0xff] %v79
    %84 = vst [vmem:[#allocation7 + $0x8] sm:$0xff] %v80
    %85 = vst [vmem:[#allocation7 + $0x10] sm:$0xff] %v81
    %86 = vst [vmem:[#allocation7 + $0x18] sm:$0xff] %v82
    // Predicated region
    $region18: #{tpu_custom_call.1} parent=1 // pred_check
      _
    $region19: #{tpu_custom_call.1} parent=1 // pred_check_branch
      %88 = sbr.rel (0) target = $region21
    $region20: #{tpu_custom_call.1} parent=1 // pred_region
      %s90 = ssub.s32 512, 512
      %91 = vsyncadd [#allocation4], %s90
      %s93 = sshll.u32 [#allocation7], 4
      %s94 = int_to_ptr.vmem [resolvable:$true] %s93
      %96 = dma.vmem_to_hbm [thread:$0]  %s94, 512, %s2, [#allocation4]
    $region21: #{tpu_custom_call.1} parent=1 // pred_fallthru
      _
    // Predicated region
    $region22: #{tpu_custom_call.1} parent=1 // pred_check
      _
    $region23: #{tpu_custom_call.1} parent=1 // pred_check_branch
      %98 = sbr.rel (0) target = $region25
    $region24: #{tpu_custom_call.1} parent=1 // pred_region
      %99 = dma.done [#allocation4], 512
    $region25: #{tpu_custom_call.1} parent=1 // pred_fallthru
      _
    %100 = vsyncpa [#allocation3], 1
    %101 = vsyncpa [#allocation6], 1
    %102 = vsyncpa [#allocation4], 1

</llo_original>
